<compile_context>
chip_gen: v7x
topology: tpu7x:2x2x1
jax: 0.10.0
libtpu: 0.0.40
codegen_flags: <defaults>
</compile_context>

<pallas_src>
import functools

import jax
import jax.numpy as jnp
from jax.experimental import pallas as pl
from jax.experimental.pallas import tpu as pltpu


_FAST_PATH_ELEMS = 1 << 18  # ~256K elements: below this, skip pallas_call entirely


def _scale_kernel(x_ref, o_ref, *, x_min, inv_range):
    # Compute in f32 (free: kernel is HBM-bound), cast once at the store.
    x = x_ref[...].astype(jnp.float32)
    o_ref[...] = ((x - x_min) * inv_range).astype(o_ref.dtype)


@functools.lru_cache(maxsize=1)
def _tile_bytes_for_device():
    """Per-block byte budget; 2x-buffered in + out => ~4x this in scoped VMEM."""
    try:
        kind = jax.devices()[0].device_kind.lower()
    except Exception:
        kind = ""
    if "v5 lite" in kind or "v5e" in kind or "v5litepod" in kind:
        return 3 * 1024 * 1024   # 4x = 12 MiB < 16 MiB default scoped-VMEM (v5e)
    if "v6" in kind or "v7" in kind:
        return 6 * 1024 * 1024   # 4x = 24 MiB < 32 MiB default limit, < 64 MiB v7x VMEM
    return 2 * 1024 * 1024       # conservative default for other / unknown chips


def _choose_lanes(n):
    """Largest lane width (multiple of 128) dividing n; 0 if none (pad slow path)."""
    for lanes in (2048, 1024, 512, 256, 128):
        if n % lanes == 0:
            return lanes
    return 0


def dataset_scaler(x, x_min, x_max, *, fast_path_elems=_FAST_PATH_ELEMS):
    """Apply (x - x_min) / (x_max - x_min) elementwise via a Pallas TPU kernel."""
    if x_min == x_max:
        # PyTorch module returns the input unchanged in this degenerate case.
        return x

    x_min_f = float(x_min)
    inv_range = 1.0 / (float(x_max) - float(x_min))

    orig_shape = x.shape
    n = x.size
    if n == 0:
        return x

    if n < fast_path_elems:
        # pallas_call fixed launch + pipeline-prime cost dominates for KB-sized
        # tensors; XLA's fused elementwise op is strictly faster here.
        y = (x.astype(jnp.float32) - x_min_f) * inv_range
        return y.astype(x.dtype)

    itemsize = jnp.dtype(x.dtype).itemsize
    lanes = _choose_lanes(n)

    xf = x.reshape(-1)
    if lanes == 0:
        # Slow path: n is not a multiple of 128.  Pad the flat array to the
        # next multiple of 128 (this materializes one extra copy) and slice
        # the result back afterwards.
        lanes = 128
        n_pad = pl.cdiv(n, lanes) * lanes
        xf = jnp.pad(xf, (0, n_pad - n))
    else:
        n_pad = n

    rows = n_pad // lanes
    x2d = xf.reshape(rows, lanes)

    # Sublane granularity: 8 for 4-byte, 16 for 2-byte, 32 for 1-byte dtypes.
    sub = max(8, 32 // itemsize)

    if rows <= sub:
        # Tiny (only reachable when fast_path_elems is overridden): one
        # full-extent block (block dims equal to array dims are always legal).
        tile_rows = rows
        grid = 1
    else:
        # Rows per block from the per-generation byte budget (multiple of sub).
        tile_rows = max(sub,
                        (_tile_bytes_for_device() // (lanes * itemsize)) // sub * sub)
        if tile_rows >= rows:
            # Split into (at least) 2 blocks so both v7x TensorCores get work;
            # harmless on single-TC v5e/v6e.
            tile_rows = max(sub, pl.cdiv(pl.cdiv(rows, 2), sub) * sub)
        grid = pl.cdiv(rows, tile_rows)  # Pallas masks the partial last block.

    kernel = functools.partial(_scale_kernel, x_min=x_min_f, inv_range=inv_range)

    out2d = pl.pallas_call(
        kernel,
        out_shape=jax.ShapeDtypeStruct((rows, lanes), x.dtype),
        grid_spec=pl.GridSpec(
            grid=(grid,),
            in_specs=[pl.BlockSpec((tile_rows, lanes), lambda i: (i, 0))],
            out_specs=pl.BlockSpec((tile_rows, lanes), lambda i: (i, 0)),
        ),
        compiler_params=pltpu.CompilerParams(
            dimension_semantics=("parallel",),
        ),
    )(x2d)

    out = out2d.reshape(-1)
    if n_pad != n:
        out = out[:n]
    return out.reshape(orig_shape)


if __name__ == "__main__":
    # Deterministic "parameters" from the module __init__ (scalar range).
    X_MIN = -2.0
    X_MAX = 3.0

    key = jax.random.PRNGKey(0)
    k0, k1, k2, k3 = jax.random.split(key, 4)

    # Small NCHW input consistent with typical usage (fast path by default).
    x = jax.random.normal(k0, (2, 4, 16, 16), dtype=jnp.float32)
    ref = (x - X_MIN) / (X_MAX - X_MIN)
    out = jax.block_until_ready(dataset_scaler(x, X_MIN, X_MAX))
    assert out.shape == x.shape
    assert jnp.allclose(out, ref, atol=1e-6, rtol=1e-5)

    # Same small input forced through the Pallas path (single full block).
    out_p = jax.block_until_ready(dataset_scaler(x, X_MIN, X_MAX, fast_path_elems=0))
    assert jnp.allclose(out_p, ref, atol=1e-6, rtol=1e-5)

    # Mid-size input: multi-block "parallel" grid with a masked partial last
    # block (rows=200 does not divide the chosen tile_rows).
    xm = jax.random.normal(k1, (25, 128, 128), dtype=jnp.float32)
    refm = (xm - X_MIN) / (X_MAX - X_MIN)
    outm = jax.block_until_ready(dataset_scaler(xm, X_MIN, X_MAX))
    assert outm.shape == xm.shape
    assert jnp.allclose(outm, refm, atol=1e-6, rtol=1e-5)

    # Larger input: exact multi-block split, no padding anywhere.
    xb = jax.random.normal(k2, (8, 16, 96, 64), dtype=jnp.float32)
    refb = (xb - X_MIN) / (X_MAX - X_MIN)
    outb = jax.block_until_ready(dataset_scaler(xb, X_MIN, X_MAX))
    assert outb.shape == xb.shape
    assert jnp.allclose(outb, refb, atol=1e-6, rtol=1e-5)

    # Odd shape (element count not a multiple of 128): lane-pad slow path.
    xo = jax.random.normal(k3, (3, 5, 7, 9), dtype=jnp.float32)
    refo = (xo - X_MIN) / (X_MAX - X_MIN)
    outo = jax.block_until_ready(dataset_scaler(xo, X_MIN, X_MAX, fast_path_elems=0))
    assert outo.shape == xo.shape
    assert jnp.allclose(outo, refo, atol=1e-6, rtol=1e-5)

    # bfloat16 input through the Pallas path: f32 compute, single cast at store.
    xh = x.astype(jnp.bfloat16)
    refh = ((x - X_MIN) / (X_MAX - X_MIN)).astype(jnp.bfloat16)
    outh = jax.block_until_ready(dataset_scaler(xh, X_MIN, X_MAX, fast_path_elems=0))
    assert outh.dtype == jnp.bfloat16
    assert jnp.allclose(outh.astype(jnp.float32), refh.astype(jnp.float32),
                        atol=1e-2, rtol=1e-2)

    # Degenerate case: x_min == x_max returns input unchanged.
    same = dataset_scaler(x, 1.5, 1.5)
    assert jnp.array_equal(same, x)

    print("KERNEL_OK")
</pallas_src>

<mosaic_0001>
module attributes {stable_mosaic.version = 11 : i64} {
  func.func @_scale_kernel(%arg0: i32, %arg1: memref<1x2048xf32, #tpu.memory_space<vmem>>, %arg2: memref<1x2048xf32, #tpu.memory_space<vmem>>) attributes {dimension_semantics = [#tpu.dimension_semantics<parallel>], iteration_bounds = array<i64: 1>, scalar_prefetch = 0 : i64, scratch_operands = 0 : i64, tpu.core_type = #tpu.core_type<tc>, window_params = [{transform_indices = @transform_0, window_bounds = array<i64: 1, 2048>}, {transform_indices = @transform_1, window_bounds = array<i64: 1, 2048>}]} {
    %c0 = arith.constant 0 : index
    %c0_0 = arith.constant 0 : index
    %0 = vector.load %arg1[%c0, %c0_0] : memref<1x2048xf32, #tpu.memory_space<vmem>>, vector<1x2048xf32>
    %cst = arith.constant -2.000000e+00 : f32
    %1 = vector.broadcast %cst : f32 to vector<1x2048xf32>
    %2 = arith.subf %0, %1 : vector<1x2048xf32>
    %cst_1 = arith.constant 2.000000e-01 : f32
    %3 = vector.broadcast %cst_1 : f32 to vector<1x2048xf32>
    %4 = arith.mulf %2, %3 : vector<1x2048xf32>
    %c0_2 = arith.constant 0 : index
    %c0_3 = arith.constant 0 : index
    %5 = vector.load %arg2[%c0_2, %c0_3] : memref<1x2048xf32, #tpu.memory_space<vmem>>, vector<1x2048xf32>
    tpu.vector_store %arg2[%c0_2, %c0_3], %4 {strides = array<i32>} : memref<1x2048xf32, #tpu.memory_space<vmem>>, vector<1x2048xf32>,
    return
  }
  func.func @transform_0(%arg0: i32) -> (i32, i32) {
    %c0_i32 = arith.constant 0 : i32
    %c0_i32_0 = arith.constant 0 : i32
    return %arg0, %c0_i32 : i32, i32
  }
  func.func @transform_1(%arg0: i32) -> (i32, i32) {
    %c0_i32 = arith.constant 0 : i32
    %c0_i32_0 = arith.constant 0 : i32
    return %arg0, %c0_i32 : i32, i32
  }
}

</mosaic_0001>

<llo_original>
// kernel: tpu_custom_call.1
$region0: #{tpu_custom_call.1}
  #allocation0 [shape = 'u32[]', space=smem, size = 0x4, offset = 0x4, fixed_abs, tag = 'smem constant byte address 0x4 - core index']
  #allocation1 [shape = 'u32[144,128]{1,0:T(1,128)}', space=vmem, size = 0x12000, scoped, tag = 'internal scratch']
  %s0 = inlined_call_operand.hbm [shape: f32[1,2048], index: 0, kind: input, shape index: {}]
  %s1 = inlined_call_operand.hbm [shape: f32[1,2048], index: 1, kind: output, shape index: {}]
  %s2 = sld [smem:[#allocation0]]
  $region18: #{tpu_custom_call.1} parent=0
    _
  %s4 = ssub.s32 1, %s2
  %s5 = scalar_select 0, %s4, %s2
  $region1: #{tpu_custom_call.1} parent=0
    #allocation2 [shape = 'u8[8192]{0}', space=vmem, size = 0x2000, scoped, tag = 'input window, operand 0, single buffered']
    #allocation3 [shape = 's32[1]{0}', space=sflag, size = 0x4, scoped, tag = 'scoped memory for tpu_custom_call.1']
    #allocation4 [shape = 's32[1]{0}', space=sflag, size = 0x4, scoped, tag = 'scoped memory for tpu_custom_call.1']
    #allocation5 [shape = 'u8[8192]{0}', space=vmem, size = 0x2000, scoped, tag = 'output window, operand 0, single buffered']
    %6 = vsyncpa [#allocation3], 0
    %7 = vsyncpa [#allocation4], 0
    // Predicated region
    $region2: #{tpu_custom_call.1} parent=1 // pred_check
      _
    $region3: #{tpu_custom_call.1} parent=1 // pred_check_branch
      %9 = sbr.rel (0) target = $region5
    $region4: #{tpu_custom_call.1} parent=1 // pred_region
      %s11 = ssub.s32 256, 256
      %12 = vsyncadd [#allocation3], %s11
      %s14 = sshll.u32 [#allocation2], 4
      %s15 = int_to_ptr.vmem [resolvable:$true] %s14
      %17 = dma.hbm_to_vmem [thread:$0]  %s0, 256, %s15, [#allocation3]
    $region5: #{tpu_custom_call.1} parent=1 // pred_fallthru
      _
    // Predicated region
    $region6: #{tpu_custom_call.1} parent=1 // pred_check
      _
    $region7: #{tpu_custom_call.1} parent=1 // pred_check_branch
      %19 = sbr.rel (0) target = $region9
    $region8: #{tpu_custom_call.1} parent=1 // pred_region
      %20 = dma.done [#allocation3], 256
    $region9: #{tpu_custom_call.1} parent=1 // pred_fallthru
      _
    %v21 = vld [vmem:[#allocation2] sm:$0xff]
    %v22 = vld [vmem:[#allocation2 + $0x8] sm:$0xff]
    %v23 = vsub.f32 %v21, -2.0
    %v24 = vsub.f32 %v22, -2.0
    %v25 = vmul.f32 %v23, 0.2
    %v26 = vmul.f32 %v24, 0.2
    %27 = vst [vmem:[#allocation5] sm:$0xff] %v25
    %28 = vst [vmem:[#allocation5 + $0x8] sm:$0xff] %v26
    // Predicated region
    $region10: #{tpu_custom_call.1} parent=1 // pred_check
      _
    $region11: #{tpu_custom_call.1} parent=1 // pred_check_branch
      %30 = sbr.rel (0) target = $region13
    $region12: #{tpu_custom_call.1} parent=1 // pred_region
      %s32 = ssub.s32 256, 256
      %33 = vsyncadd [#allocation4], %s32
      %s35 = sshll.u32 [#allocation5], 4
      %s36 = int_to_ptr.vmem [resolvable:$true] %s35
      %38 = dma.vmem_to_hbm [thread:$0]  %s36, 256, %s1, [#allocation4]
    $region13: #{tpu_custom_call.1} parent=1 // pred_fallthru
      _
    // Predicated region
    $region14: #{tpu_custom_call.1} parent=1 // pred_check
      _
    $region15: #{tpu_custom_call.1} parent=1 // pred_check_branch
      %40 = sbr.rel (0) target = $region17
    $region16: #{tpu_custom_call.1} parent=1 // pred_region
      %41 = dma.done [#allocation4], 256
    $region17: #{tpu_custom_call.1} parent=1 // pred_fallthru
      _
    %42 = vsyncpa [#allocation3], 1
    %43 = vsyncpa [#allocation4], 1

</llo_original>
